<compile_context>
chip_gen: v6e
topology: v6e:2x2x1
jax: 0.10.0
libtpu: 0.0.40
codegen_flags: <defaults>
</compile_context>

<pallas_src>
import jax
import jax.numpy as jnp
from jax.experimental import pallas as pl
from jax.experimental.pallas import tpu as pltpu


def _projection_kernel(trans_ref, pc_ref, out_ref):
    # trans_ref: SMEM (B*V*12,) f32    -- flattened trans_mat_right (B, V, 4, 3)
    # pc_ref:    VMEM (1, 3, TS, 128)  -- sublane/lane-dense point slab tile
    # out_ref:   VMEM (1, V, 3, TS, 128) -- rows 0/1 = xy, row 2 = z
    b = pl.program_id(0)
    n_views = out_ref.shape[1]

    px = pc_ref[0, 0]          # (TS, 128) -- dense full vregs
    py = pc_ref[0, 1]
    pz = pc_ref[0, 2]

    two = jnp.float32(2.0)

    base_b = b * (n_views * 12)
    for v in range(n_views):   # small, static -> fully unrolled
        base = base_b + v * 12
        # trans_mat_right[b, v] is row-major (4, 3): T[k, j] at base + 3*k + j
        t00 = trans_ref[base + 0]
        t01 = trans_ref[base + 1]
        t02 = trans_ref[base + 2]
        t10 = trans_ref[base + 3]
        t11 = trans_ref[base + 4]
        t12 = trans_ref[base + 5]
        t20 = trans_ref[base + 6]
        t21 = trans_ref[base + 7]
        t22 = trans_ref[base + 8]
        t30 = trans_ref[base + 9]
        t31 = trans_ref[base + 10]
        t32 = trans_ref[base + 11]

        # xyz_j = x*T[0,j] + y*T[1,j] + z*T[2,j] + T[3,j]   (VPU FMAs, no MXU)
        x = px * t00 + py * t10 + pz * t20 + t30
        y = px * t01 + py * t11 + pz * t21 + t31
        z = px * t02 + py * t12 + pz * t22 + t32

        # replace exact zeros only (mirrors the PyTorch torch.where)
        z = jnp.where(z != 0.0, z, jnp.float32(1e-8))

        # EUP approx reciprocal + one Newton-Raphson refinement -> ~f32 precision
        inv_z = pl.reciprocal(z, approx=True)
        inv_z = inv_z * (two - z * inv_z)

        # direct per-row stores: full unmasked vst, no sublane concat shuffles
        out_ref[0, v, 0] = x * inv_z
        out_ref[0, v, 1] = jnp.float32(224.0) - y * inv_z
        out_ref[0, v, 2] = z


def _choose_tiling(n_slabs, batch):
    """Pick (slabs_per_tile, n_tiles).

    slabs_per_tile is a multiple of 8 (sublane constraint on the second-minor
    block dim) or equal to the full slab count.  Cap = 128 slabs = 16384 points
    per tile (~1.5 MiB double-buffered at V=3).  When B == 1, split the slab
    axis so the 'parallel' grid has >= 2 steps (feeds both v7x TensorCores).
    """
    cap = 128
    if n_slabs > cap:
        n_tiles = -(-n_slabs // cap)                  # ceil
        per = -(-n_slabs // n_tiles)                  # ceil
        ts = -(-per // 8) * 8                         # round up to multiple of 8
        return ts, n_tiles
    if batch == 1 and n_slabs >= 16:
        ts = max(8, (n_slabs // 2) // 8 * 8)
        return ts, -(-n_slabs // ts)
    return n_slabs, 1


def projection_cp(pc_cp, trans_mat_right):
    """Coord-major fast path.

    pc_cp:            (B, 3, PN)   float32
    trans_mat_right:  (B, V, 4, 3) float32
    returns           (B, V, 3, PN): rows 0/1 = xy, row 2 = z
    """
    pc_cp = pc_cp.astype(jnp.float32)
    trans_mat_right = trans_mat_right.astype(jnp.float32)
    B, _, PN = pc_cp.shape
    V = trans_mat_right.shape[1]

    # Lane-dense slab layout: pad PN to a multiple of 128, reshape to (S, 128).
    n_slabs0 = -(-PN // 128)
    ts, n_tiles = _choose_tiling(n_slabs0, B)
    n_slabs = ts * n_tiles
    pn_pad = n_slabs * 128
    if pn_pad != PN:
        pc_cp = jnp.pad(pc_cp, ((0, 0), (0, 0), (0, pn_pad - PN)))

    pc_slab = pc_cp.reshape(B, 3, n_slabs, 128)       # free row-major reinterpretation
    trans_flat = trans_mat_right.reshape(-1)          # (B*V*12,) -> SMEM via prefetch

    out_slab = pl.pallas_call(
        _projection_kernel,
        out_shape=jax.ShapeDtypeStruct((B, V, 3, n_slabs, 128), jnp.float32),
        grid_spec=pltpu.PrefetchScalarGridSpec(
            num_scalar_prefetch=1,
            grid=(B, n_tiles),
            in_specs=[
                pl.BlockSpec((1, 3, ts, 128), lambda b, t, tr: (b, 0, t, 0)),
            ],
            out_specs=pl.BlockSpec((1, V, 3, ts, 128),
                                   lambda b, t, tr: (b, 0, 0, t, 0)),
        ),
        compiler_params=pltpu.CompilerParams(
            dimension_semantics=("parallel", "parallel")),
        cost_estimate=pl.CostEstimate(
            flops=26 * B * V * pn_pad,
            transcendentals=B * V * pn_pad,
            bytes_accessed=4 * (B * 3 * pn_pad + B * V * 12 + B * V * 3 * pn_pad)),
    )(trans_flat, pc_slab)

    out_cp = out_slab.reshape(B, V, 3, pn_pad)
    if pn_pad != PN:
        out_cp = out_cp[..., :PN]
    return out_cp


def projection(sample_pc, trans_mat_right):
    """PyTorch-layout wrapper of Projection.forward.

    sample_pc:        (B, PN, 3) float32
    trans_mat_right:  (B, V, 4, 3) float32
    returns (pc_xy (B, V, PN, 2), pc_z (B, V, PN))
    """
    sample_pc = sample_pc.astype(jnp.float32)
    trans_mat_right = trans_mat_right.astype(jnp.float32)

    pc_cp = jnp.transpose(sample_pc, (0, 2, 1))       # (B, 3, PN) layout plumbing
    out_cp = projection_cp(pc_cp, trans_mat_right)    # (B, V, 3, PN)

    pc_xy = jnp.transpose(out_cp[:, :, 0:2, :], (0, 1, 3, 2))   # (B, V, PN, 2)
    pc_z = out_cp[:, :, 2, :]                                   # (B, V, PN)
    return pc_xy, pc_z


def projection_ref(sample_pc, trans_mat_right):
    """Plain-JAX reference mirroring the PyTorch forward semantics."""
    B, PN, _ = sample_pc.shape
    V = trans_mat_right.shape[1]
    homo = jnp.concatenate([sample_pc, jnp.ones((B, PN, 1), jnp.float32)], axis=-1)
    homo = jnp.broadcast_to(homo[:, None], (B, V, PN, 4))
    xyz = jnp.einsum('bvpk,bvkj->bvpj', homo, trans_mat_right)
    z = xyz[..., 2:3]
    z = jnp.where(z != 0.0, z, jnp.float32(1e-8))
    xy = xyz[..., :2] / z
    xy = xy.at[..., 1].set(224.0 - xy[..., 1])
    return xy, z[..., 0]


def _check(B, PN, V, key):
    k1, k2 = jax.random.split(key)
    sample_pc = jax.random.normal(k1, (B, PN, 3), dtype=jnp.float32)
    trans_mat_right = jax.random.normal(k2, (B, V, 4, 3), dtype=jnp.float32)

    pc_xy, pc_z = projection(sample_pc, trans_mat_right)
    jax.block_until_ready((pc_xy, pc_z))

    ref_xy, ref_z = projection_ref(sample_pc, trans_mat_right)
    assert pc_xy.shape == (B, V, PN, 2) and pc_z.shape == (B, V, PN)
    assert jnp.allclose(pc_xy, ref_xy, atol=1e-4, rtol=1e-4), "pc_xy mismatch"
    assert jnp.allclose(pc_z, ref_z, atol=1e-5, rtol=1e-5), "pc_z mismatch"


if __name__ == "__main__":
    key = jax.random.PRNGKey(0)
    ka, kb = jax.random.split(key)
    # Small canonical shapes (B=2, PN=8, V=3): single-tile, padded to one 128-slab.
    _check(2, 8, 3, ka)
    # B=1, ragged PN: exercises padding, multi-tile slab split (v7x 2-TC path).
    _check(1, 2500, 2, kb)
    print("KERNEL_OK")
</pallas_src>

<mosaic_0001>
module attributes {stable_mosaic.version = 11 : i64} {
  func.func @_projection_kernel(%arg0: i32, %arg1: i32, %arg2: memref<72xf32, #tpu.memory_space<smem>>, %arg3: memref<1x3x1x128xf32, #tpu.memory_space<vmem>>, %arg4: memref<1x3x3x1x128xf32, #tpu.memory_space<vmem>>) attributes {dimension_semantics = [#tpu.dimension_semantics<parallel>, #tpu.dimension_semantics<parallel>], iteration_bounds = array<i64: 2, 1>, scalar_prefetch = 1 : i64, scratch_operands = 0 : i64, tpu.core_type = #tpu.core_type<tc>, window_params = [{transform_indices = @transform_0, window_bounds = array<i64: 1, 3, 1, 128>}, {transform_indices = @transform_1, window_bounds = array<i64: 1, 3, 3, 1, 128>}]} {
    %c0 = arith.constant 0 : index
    %c0_0 = arith.constant 0 : index
    %c0_1 = arith.constant 0 : index
    %c0_2 = arith.constant 0 : index
    %0 = vector.load %arg3[%c0, %c0_0, %c0_1, %c0_2] : memref<1x3x1x128xf32, #tpu.memory_space<vmem>>, vector<1x1x1x128xf32>
    %1 = vector.shape_cast %0 : vector<1x1x1x128xf32> to vector<1x128xf32>
    %c0_3 = arith.constant 0 : index
    %c1 = arith.constant 1 : index
    %c0_4 = arith.constant 0 : index
    %c0_5 = arith.constant 0 : index
    %2 = vector.load %arg3[%c0_3, %c1, %c0_4, %c0_5] : memref<1x3x1x128xf32, #tpu.memory_space<vmem>>, vector<1x1x1x128xf32>
    %3 = vector.shape_cast %2 : vector<1x1x1x128xf32> to vector<1x128xf32>
    %c0_6 = arith.constant 0 : index
    %c2 = arith.constant 2 : index
    %c0_7 = arith.constant 0 : index
    %c0_8 = arith.constant 0 : index
    %4 = vector.load %arg3[%c0_6, %c2, %c0_7, %c0_8] : memref<1x3x1x128xf32, #tpu.memory_space<vmem>>, vector<1x1x1x128xf32>
    %5 = vector.shape_cast %4 : vector<1x1x1x128xf32> to vector<1x128xf32>
    %c36_i32 = arith.constant 36 : i32
    %6 = arith.muli %arg0, %c36_i32 : i32
    %c0_i32 = arith.constant 0 : i32
    %7 = arith.addi %6, %c0_i32 : i32
    %c0_i32_9 = arith.constant 0 : i32
    %8 = arith.addi %7, %c0_i32_9 : i32
    %9 = arith.index_cast %8 : i32 to index
    %10 = memref.load %arg2[%9] : memref<72xf32, #tpu.memory_space<smem>>
    %c1_i32 = arith.constant 1 : i32
    %11 = arith.addi %7, %c1_i32 : i32
    %12 = arith.index_cast %11 : i32 to index
    %13 = memref.load %arg2[%12] : memref<72xf32, #tpu.memory_space<smem>>
    %c2_i32 = arith.constant 2 : i32
    %14 = arith.addi %7, %c2_i32 : i32
    %15 = arith.index_cast %14 : i32 to index
    %16 = memref.load %arg2[%15] : memref<72xf32, #tpu.memory_space<smem>>
    %c3_i32 = arith.constant 3 : i32
    %17 = arith.addi %7, %c3_i32 : i32
    %18 = arith.index_cast %17 : i32 to index
    %19 = memref.load %arg2[%18] : memref<72xf32, #tpu.memory_space<smem>>
    %c4_i32 = arith.constant 4 : i32
    %20 = arith.addi %7, %c4_i32 : i32
    %21 = arith.index_cast %20 : i32 to index
    %22 = memref.load %arg2[%21] : memref<72xf32, #tpu.memory_space<smem>>
    %c5_i32 = arith.constant 5 : i32
    %23 = arith.addi %7, %c5_i32 : i32
    %24 = arith.index_cast %23 : i32 to index
    %25 = memref.load %arg2[%24] : memref<72xf32, #tpu.memory_space<smem>>
    %c6_i32 = arith.constant 6 : i32
    %26 = arith.addi %7, %c6_i32 : i32
    %27 = arith.index_cast %26 : i32 to index
    %28 = memref.load %arg2[%27] : memref<72xf32, #tpu.memory_space<smem>>
    %c7_i32 = arith.constant 7 : i32
    %29 = arith.addi %7, %c7_i32 : i32
    %30 = arith.index_cast %29 : i32 to index
    %31 = memref.load %arg2[%30] : memref<72xf32, #tpu.memory_space<smem>>
    %c8_i32 = arith.constant 8 : i32
    %32 = arith.addi %7, %c8_i32 : i32
    %33 = arith.index_cast %32 : i32 to index
    %34 = memref.load %arg2[%33] : memref<72xf32, #tpu.memory_space<smem>>
    %c9_i32 = arith.constant 9 : i32
    %35 = arith.addi %7, %c9_i32 : i32
    %36 = arith.index_cast %35 : i32 to index
    %37 = memref.load %arg2[%36] : memref<72xf32, #tpu.memory_space<smem>>
    %c10_i32 = arith.constant 10 : i32
    %38 = arith.addi %7, %c10_i32 : i32
    %39 = arith.index_cast %38 : i32 to index
    %40 = memref.load %arg2[%39] : memref<72xf32, #tpu.memory_space<smem>>
    %c11_i32 = arith.constant 11 : i32
    %41 = arith.addi %7, %c11_i32 : i32
    %42 = arith.index_cast %41 : i32 to index
    %43 = memref.load %arg2[%42] : memref<72xf32, #tpu.memory_space<smem>>
    %44 = vector.broadcast %10 : f32 to vector<1x128xf32>
    %45 = arith.mulf %1, %44 : vector<1x128xf32>
    %46 = vector.broadcast %19 : f32 to vector<1x128xf32>
    %47 = arith.mulf %3, %46 : vector<1x128xf32>
    %48 = arith.addf %45, %47 : vector<1x128xf32>
    %49 = vector.broadcast %28 : f32 to vector<1x128xf32>
    %50 = arith.mulf %5, %49 : vector<1x128xf32>
    %51 = arith.addf %48, %50 : vector<1x128xf32>
    %52 = vector.broadcast %37 : f32 to vector<1x128xf32>
    %53 = arith.addf %51, %52 : vector<1x128xf32>
    %54 = vector.broadcast %13 : f32 to vector<1x128xf32>
    %55 = arith.mulf %1, %54 : vector<1x128xf32>
    %56 = vector.broadcast %22 : f32 to vector<1x128xf32>
    %57 = arith.mulf %3, %56 : vector<1x128xf32>
    %58 = arith.addf %55, %57 : vector<1x128xf32>
    %59 = vector.broadcast %31 : f32 to vector<1x128xf32>
    %60 = arith.mulf %5, %59 : vector<1x128xf32>
    %61 = arith.addf %58, %60 : vector<1x128xf32>
    %62 = vector.broadcast %40 : f32 to vector<1x128xf32>
    %63 = arith.addf %61, %62 : vector<1x128xf32>
    %64 = vector.broadcast %16 : f32 to vector<1x128xf32>
    %65 = arith.mulf %1, %64 : vector<1x128xf32>
    %66 = vector.broadcast %25 : f32 to vector<1x128xf32>
    %67 = arith.mulf %3, %66 : vector<1x128xf32>
    %68 = arith.addf %65, %67 : vector<1x128xf32>
    %69 = vector.broadcast %34 : f32 to vector<1x128xf32>
    %70 = arith.mulf %5, %69 : vector<1x128xf32>
    %71 = arith.addf %68, %70 : vector<1x128xf32>
    %72 = vector.broadcast %43 : f32 to vector<1x128xf32>
    %73 = arith.addf %71, %72 : vector<1x128xf32>
    %cst = arith.constant 0.000000e+00 : f32
    %74 = vector.broadcast %cst : f32 to vector<1x128xf32>
    %75 = arith.cmpf one, %73, %74 : vector<1x128xf32>
    %cst_10 = arith.constant 9.99999993E-9 : f32
    %76 = vector.broadcast %cst_10 : f32 to vector<1x128xf32>
    %77 = arith.select %75, %73, %76 : vector<1x128xi1>, vector<1x128xf32>
    %78 = tpu.reciprocal %77 {approx = true} : vector<1x128xf32> -> vector<1x128xf32>
    %79 = arith.mulf %77, %78 : vector<1x128xf32>
    %cst_11 = arith.constant 2.000000e+00 : f32
    %80 = vector.broadcast %cst_11 : f32 to vector<1x128xf32>
    %81 = arith.subf %80, %79 : vector<1x128xf32>
    %82 = arith.mulf %78, %81 : vector<1x128xf32>
    %83 = arith.mulf %53, %82 : vector<1x128xf32>
    %c0_12 = arith.constant 0 : index
    %c0_13 = arith.constant 0 : index
    %c0_14 = arith.constant 0 : index
    %c0_15 = arith.constant 0 : index
    %c0_16 = arith.constant 0 : index
    %84 = vector.load %arg4[%c0_12, %c0_13, %c0_14, %c0_15, %c0_16] : memref<1x3x3x1x128xf32, #tpu.memory_space<vmem>>, vector<1x1x1x1x128xf32>
    %85 = vector.shape_cast %84 : vector<1x1x1x1x128xf32> to vector<1x128xf32>
    %86 = vector.shape_cast %83 : vector<1x128xf32> to vector<1x1x1x1x128xf32>
    tpu.vector_store %arg4[%c0_12, %c0_13, %c0_14, %c0_15, %c0_16], %86 {strides = array<i32>} : memref<1x3x3x1x128xf32, #tpu.memory_space<vmem>>, vector<1x1x1x1x128xf32>,
    %87 = arith.mulf %63, %82 : vector<1x128xf32>
    %cst_17 = arith.constant 2.240000e+02 : f32
    %88 = vector.broadcast %cst_17 : f32 to vector<1x128xf32>
    %89 = arith.subf %88, %87 : vector<1x128xf32>
    %c0_18 = arith.constant 0 : index
    %c0_19 = arith.constant 0 : index
    %c1_20 = arith.constant 1 : index
    %c0_21 = arith.constant 0 : index
    %c0_22 = arith.constant 0 : index
    %90 = vector.load %arg4[%c0_18, %c0_19, %c1_20, %c0_21, %c0_22] : memref<1x3x3x1x128xf32, #tpu.memory_space<vmem>>, vector<1x1x1x1x128xf32>
    %91 = vector.shape_cast %90 : vector<1x1x1x1x128xf32> to vector<1x128xf32>
    %92 = vector.shape_cast %89 : vector<1x128xf32> to vector<1x1x1x1x128xf32>
    tpu.vector_store %arg4[%c0_18, %c0_19, %c1_20, %c0_21, %c0_22], %92 {strides = array<i32>} : memref<1x3x3x1x128xf32, #tpu.memory_space<vmem>>, vector<1x1x1x1x128xf32>,
    %c0_23 = arith.constant 0 : index
    %c0_24 = arith.constant 0 : index
    %c2_25 = arith.constant 2 : index
    %c0_26 = arith.constant 0 : index
    %c0_27 = arith.constant 0 : index
    %93 = vector.load %arg4[%c0_23, %c0_24, %c2_25, %c0_26, %c0_27] : memref<1x3x3x1x128xf32, #tpu.memory_space<vmem>>, vector<1x1x1x1x128xf32>
    %94 = vector.shape_cast %93 : vector<1x1x1x1x128xf32> to vector<1x128xf32>
    %95 = vector.shape_cast %77 : vector<1x128xf32> to vector<1x1x1x1x128xf32>
    tpu.vector_store %arg4[%c0_23, %c0_24, %c2_25, %c0_26, %c0_27], %95 {strides = array<i32>} : memref<1x3x3x1x128xf32, #tpu.memory_space<vmem>>, vector<1x1x1x1x128xf32>,
    %c12_i32 = arith.constant 12 : i32
    %96 = arith.addi %6, %c12_i32 : i32
    %c0_i32_28 = arith.constant 0 : i32
    %97 = arith.addi %96, %c0_i32_28 : i32
    %98 = arith.index_cast %97 : i32 to index
    %99 = memref.load %arg2[%98] : memref<72xf32, #tpu.memory_space<smem>>
    %c1_i32_29 = arith.constant 1 : i32
    %100 = arith.addi %96, %c1_i32_29 : i32
    %101 = arith.index_cast %100 : i32 to index
    %102 = memref.load %arg2[%101] : memref<72xf32, #tpu.memory_space<smem>>
    %c2_i32_30 = arith.constant 2 : i32
    %103 = arith.addi %96, %c2_i32_30 : i32
    %104 = arith.index_cast %103 : i32 to index
    %105 = memref.load %arg2[%104] : memref<72xf32, #tpu.memory_space<smem>>
    %c3_i32_31 = arith.constant 3 : i32
    %106 = arith.addi %96, %c3_i32_31 : i32
    %107 = arith.index_cast %106 : i32 to index
    %108 = memref.load %arg2[%107] : memref<72xf32, #tpu.memory_space<smem>>
    %c4_i32_32 = arith.constant 4 : i32
    %109 = arith.addi %96, %c4_i32_32 : i32
    %110 = arith.index_cast %109 : i32 to index
    %111 = memref.load %arg2[%110] : memref<72xf32, #tpu.memory_space<smem>>
    %c5_i32_33 = arith.constant 5 : i32
    %112 = arith.addi %96, %c5_i32_33 : i32
    %113 = arith.index_cast %112 : i32 to index
    %114 = memref.load %arg2[%113] : memref<72xf32, #tpu.memory_space<smem>>
    %c6_i32_34 = arith.constant 6 : i32
    %115 = arith.addi %96, %c6_i32_34 : i32
    %116 = arith.index_cast %115 : i32 to index
    %117 = memref.load %arg2[%116] : memref<72xf32, #tpu.memory_space<smem>>
    %c7_i32_35 = arith.constant 7 : i32
    %118 = arith.addi %96, %c7_i32_35 : i32
    %119 = arith.index_cast %118 : i32 to index
    %120 = memref.load %arg2[%119] : memref<72xf32, #tpu.memory_space<smem>>
    %c8_i32_36 = arith.constant 8 : i32
    %121 = arith.addi %96, %c8_i32_36 : i32
    %122 = arith.index_cast %121 : i32 to index
    %123 = memref.load %arg2[%122] : memref<72xf32, #tpu.memory_space<smem>>
    %c9_i32_37 = arith.constant 9 : i32
    %124 = arith.addi %96, %c9_i32_37 : i32
    %125 = arith.index_cast %124 : i32 to index
    %126 = memref.load %arg2[%125] : memref<72xf32, #tpu.memory_space<smem>>
    %c10_i32_38 = arith.constant 10 : i32
    %127 = arith.addi %96, %c10_i32_38 : i32
    %128 = arith.index_cast %127 : i32 to index
    %129 = memref.load %arg2[%128] : memref<72xf32, #tpu.memory_space<smem>>
    %c11_i32_39 = arith.constant 11 : i32
    %130 = arith.addi %96, %c11_i32_39 : i32
    %131 = arith.index_cast %130 : i32 to index
    %132 = memref.load %arg2[%131] : memref<72xf32, #tpu.memory_space<smem>>
    %133 = vector.broadcast %99 : f32 to vector<1x128xf32>
    %134 = arith.mulf %1, %133 : vector<1x128xf32>
    %135 = vector.broadcast %108 : f32 to vector<1x128xf32>
    %136 = arith.mulf %3, %135 : vector<1x128xf32>
    %137 = arith.addf %134, %136 : vector<1x128xf32>
    %138 = vector.broadcast %117 : f32 to vector<1x128xf32>
    %139 = arith.mulf %5, %138 : vector<1x128xf32>
    %140 = arith.addf %137, %139 : vector<1x128xf32>
    %141 = vector.broadcast %126 : f32 to vector<1x128xf32>
    %142 = arith.addf %140, %141 : vector<1x128xf32>
    %143 = vector.broadcast %102 : f32 to vector<1x128xf32>
    %144 = arith.mulf %1, %143 : vector<1x128xf32>
    %145 = vector.broadcast %111 : f32 to vector<1x128xf32>
    %146 = arith.mulf %3, %145 : vector<1x128xf32>
    %147 = arith.addf %144, %146 : vector<1x128xf32>
    %148 = vector.broadcast %120 : f32 to vector<1x128xf32>
    %149 = arith.mulf %5, %148 : vector<1x128xf32>
    %150 = arith.addf %147, %149 : vector<1x128xf32>
    %151 = vector.broadcast %129 : f32 to vector<1x128xf32>
    %152 = arith.addf %150, %151 : vector<1x128xf32>
    %153 = vector.broadcast %105 : f32 to vector<1x128xf32>
    %154 = arith.mulf %1, %153 : vector<1x128xf32>
    %155 = vector.broadcast %114 : f32 to vector<1x128xf32>
    %156 = arith.mulf %3, %155 : vector<1x128xf32>
    %157 = arith.addf %154, %156 : vector<1x128xf32>
    %158 = vector.broadcast %123 : f32 to vector<1x128xf32>
    %159 = arith.mulf %5, %158 : vector<1x128xf32>
    %160 = arith.addf %157, %159 : vector<1x128xf32>
    %161 = vector.broadcast %132 : f32 to vector<1x128xf32>
    %162 = arith.addf %160, %161 : vector<1x128xf32>
    %cst_40 = arith.constant 0.000000e+00 : f32
    %163 = vector.broadcast %cst_40 : f32 to vector<1x128xf32>
    %164 = arith.cmpf one, %162, %163 : vector<1x128xf32>
    %cst_41 = arith.constant 9.99999993E-9 : f32
    %165 = vector.broadcast %cst_41 : f32 to vector<1x128xf32>
    %166 = arith.select %164, %162, %165 : vector<1x128xi1>, vector<1x128xf32>
    %167 = tpu.reciprocal %166 {approx = true} : vector<1x128xf32> -> vector<1x128xf32>
    %168 = arith.mulf %166, %167 : vector<1x128xf32>
    %cst_42 = arith.constant 2.000000e+00 : f32
    %169 = vector.broadcast %cst_42 : f32 to vector<1x128xf32>
    %170 = arith.subf %169, %168 : vector<1x128xf32>
    %171 = arith.mulf %167, %170 : vector<1x128xf32>
    %172 = arith.mulf %142, %171 : vector<1x128xf32>
    %c0_43 = arith.constant 0 : index
    %c1_44 = arith.constant 1 : index
    %c0_45 = arith.constant 0 : index
    %c0_46 = arith.constant 0 : index
    %c0_47 = arith.constant 0 : index
    %173 = vector.load %arg4[%c0_43, %c1_44, %c0_45, %c0_46, %c0_47] : memref<1x3x3x1x128xf32, #tpu.memory_space<vmem>>, vector<1x1x1x1x128xf32>
    %174 = vector.shape_cast %173 : vector<1x1x1x1x128xf32> to vector<1x128xf32>
    %175 = vector.shape_cast %172 : vector<1x128xf32> to vector<1x1x1x1x128xf32>
    tpu.vector_store %arg4[%c0_43, %c1_44, %c0_45, %c0_46, %c0_47], %175 {strides = array<i32>} : memref<1x3x3x1x128xf32, #tpu.memory_space<vmem>>, vector<1x1x1x1x128xf32>,
    %176 = arith.mulf %152, %171 : vector<1x128xf32>
    %cst_48 = arith.constant 2.240000e+02 : f32
    %177 = vector.broadcast %cst_48 : f32 to vector<1x128xf32>
    %178 = arith.subf %177, %176 : vector<1x128xf32>
    %c0_49 = arith.constant 0 : index
    %c1_50 = arith.constant 1 : index
    %c1_51 = arith.constant 1 : index
    %c0_52 = arith.constant 0 : index
    %c0_53 = arith.constant 0 : index
    %179 = vector.load %arg4[%c0_49, %c1_50, %c1_51, %c0_52, %c0_53] : memref<1x3x3x1x128xf32, #tpu.memory_space<vmem>>, vector<1x1x1x1x128xf32>
    %180 = vector.shape_cast %179 : vector<1x1x1x1x128xf32> to vector<1x128xf32>
    %181 = vector.shape_cast %178 : vector<1x128xf32> to vector<1x1x1x1x128xf32>
    tpu.vector_store %arg4[%c0_49, %c1_50, %c1_51, %c0_52, %c0_53], %181 {strides = array<i32>} : memref<1x3x3x1x128xf32, #tpu.memory_space<vmem>>, vector<1x1x1x1x128xf32>,
    %c0_54 = arith.constant 0 : index
    %c1_55 = arith.constant 1 : index
    %c2_56 = arith.constant 2 : index
    %c0_57 = arith.constant 0 : index
    %c0_58 = arith.constant 0 : index
    %182 = vector.load %arg4[%c0_54, %c1_55, %c2_56, %c0_57, %c0_58] : memref<1x3x3x1x128xf32, #tpu.memory_space<vmem>>, vector<1x1x1x1x128xf32>
    %183 = vector.shape_cast %182 : vector<1x1x1x1x128xf32> to vector<1x128xf32>
    %184 = vector.shape_cast %166 : vector<1x128xf32> to vector<1x1x1x1x128xf32>
    tpu.vector_store %arg4[%c0_54, %c1_55, %c2_56, %c0_57, %c0_58], %184 {strides = array<i32>} : memref<1x3x3x1x128xf32, #tpu.memory_space<vmem>>, vector<1x1x1x1x128xf32>,
    %c24_i32 = arith.constant 24 : i32
    %185 = arith.addi %6, %c24_i32 : i32
    %c0_i32_59 = arith.constant 0 : i32
    %186 = arith.addi %185, %c0_i32_59 : i32
    %187 = arith.index_cast %186 : i32 to index
    %188 = memref.load %arg2[%187] : memref<72xf32, #tpu.memory_space<smem>>
    %c1_i32_60 = arith.constant 1 : i32
    %189 = arith.addi %185, %c1_i32_60 : i32
    %190 = arith.index_cast %189 : i32 to index
    %191 = memref.load %arg2[%190] : memref<72xf32, #tpu.memory_space<smem>>
    %c2_i32_61 = arith.constant 2 : i32
    %192 = arith.addi %185, %c2_i32_61 : i32
    %193 = arith.index_cast %192 : i32 to index
    %194 = memref.load %arg2[%193] : memref<72xf32, #tpu.memory_space<smem>>
    %c3_i32_62 = arith.constant 3 : i32
    %195 = arith.addi %185, %c3_i32_62 : i32
    %196 = arith.index_cast %195 : i32 to index
    %197 = memref.load %arg2[%196] : memref<72xf32, #tpu.memory_space<smem>>
    %c4_i32_63 = arith.constant 4 : i32
    %198 = arith.addi %185, %c4_i32_63 : i32
    %199 = arith.index_cast %198 : i32 to index
    %200 = memref.load %arg2[%199] : memref<72xf32, #tpu.memory_space<smem>>
    %c5_i32_64 = arith.constant 5 : i32
    %201 = arith.addi %185, %c5_i32_64 : i32
    %202 = arith.index_cast %201 : i32 to index
    %203 = memref.load %arg2[%202] : memref<72xf32, #tpu.memory_space<smem>>
    %c6_i32_65 = arith.constant 6 : i32
    %204 = arith.addi %185, %c6_i32_65 : i32
    %205 = arith.index_cast %204 : i32 to index
    %206 = memref.load %arg2[%205] : memref<72xf32, #tpu.memory_space<smem>>
    %c7_i32_66 = arith.constant 7 : i32
    %207 = arith.addi %185, %c7_i32_66 : i32
    %208 = arith.index_cast %207 : i32 to index
    %209 = memref.load %arg2[%208] : memref<72xf32, #tpu.memory_space<smem>>
    %c8_i32_67 = arith.constant 8 : i32
    %210 = arith.addi %185, %c8_i32_67 : i32
    %211 = arith.index_cast %210 : i32 to index
    %212 = memref.load %arg2[%211] : memref<72xf32, #tpu.memory_space<smem>>
    %c9_i32_68 = arith.constant 9 : i32
    %213 = arith.addi %185, %c9_i32_68 : i32
    %214 = arith.index_cast %213 : i32 to index
    %215 = memref.load %arg2[%214] : memref<72xf32, #tpu.memory_space<smem>>
    %c10_i32_69 = arith.constant 10 : i32
    %216 = arith.addi %185, %c10_i32_69 : i32
    %217 = arith.index_cast %216 : i32 to index
    %218 = memref.load %arg2[%217] : memref<72xf32, #tpu.memory_space<smem>>
    %c11_i32_70 = arith.constant 11 : i32
    %219 = arith.addi %185, %c11_i32_70 : i32
    %220 = arith.index_cast %219 : i32 to index
    %221 = memref.load %arg2[%220] : memref<72xf32, #tpu.memory_space<smem>>
    %222 = vector.broadcast %188 : f32 to vector<1x128xf32>
    %223 = arith.mulf %1, %222 : vector<1x128xf32>
    %224 = vector.broadcast %197 : f32 to vector<1x128xf32>
    %225 = arith.mulf %3, %224 : vector<1x128xf32>
    %226 = arith.addf %223, %225 : vector<1x128xf32>
    %227 = vector.broadcast %206 : f32 to vector<1x128xf32>
    %228 = arith.mulf %5, %227 : vector<1x128xf32>
    %229 = arith.addf %226, %228 : vector<1x128xf32>
    %230 = vector.broadcast %215 : f32 to vector<1x128xf32>
    %231 = arith.addf %229, %230 : vector<1x128xf32>
    %232 = vector.broadcast %191 : f32 to vector<1x128xf32>
    %233 = arith.mulf %1, %232 : vector<1x128xf32>
    %234 = vector.broadcast %200 : f32 to vector<1x128xf32>
    %235 = arith.mulf %3, %234 : vector<1x128xf32>
    %236 = arith.addf %233, %235 : vector<1x128xf32>
    %237 = vector.broadcast %209 : f32 to vector<1x128xf32>
    %238 = arith.mulf %5, %237 : vector<1x128xf32>
    %239 = arith.addf %236, %238 : vector<1x128xf32>
    %240 = vector.broadcast %218 : f32 to vector<1x128xf32>
    %241 = arith.addf %239, %240 : vector<1x128xf32>
    %242 = vector.broadcast %194 : f32 to vector<1x128xf32>
    %243 = arith.mulf %1, %242 : vector<1x128xf32>
    %244 = vector.broadcast %203 : f32 to vector<1x128xf32>
    %245 = arith.mulf %3, %244 : vector<1x128xf32>
    %246 = arith.addf %243, %245 : vector<1x128xf32>
    %247 = vector.broadcast %212 : f32 to vector<1x128xf32>
    %248 = arith.mulf %5, %247 : vector<1x128xf32>
    %249 = arith.addf %246, %248 : vector<1x128xf32>
    %250 = vector.broadcast %221 : f32 to vector<1x128xf32>
    %251 = arith.addf %249, %250 : vector<1x128xf32>
    %cst_71 = arith.constant 0.000000e+00 : f32
    %252 = vector.broadcast %cst_71 : f32 to vector<1x128xf32>
    %253 = arith.cmpf one, %251, %252 : vector<1x128xf32>
    %cst_72 = arith.constant 9.99999993E-9 : f32
    %254 = vector.broadcast %cst_72 : f32 to vector<1x128xf32>
    %255 = arith.select %253, %251, %254 : vector<1x128xi1>, vector<1x128xf32>
    %256 = tpu.reciprocal %255 {approx = true} : vector<1x128xf32> -> vector<1x128xf32>
    %257 = arith.mulf %255, %256 : vector<1x128xf32>
    %cst_73 = arith.constant 2.000000e+00 : f32
    %258 = vector.broadcast %cst_73 : f32 to vector<1x128xf32>
    %259 = arith.subf %258, %257 : vector<1x128xf32>
    %260 = arith.mulf %256, %259 : vector<1x128xf32>
    %261 = arith.mulf %231, %260 : vector<1x128xf32>
    %c0_74 = arith.constant 0 : index
    %c2_75 = arith.constant 2 : index
    %c0_76 = arith.constant 0 : index
    %c0_77 = arith.constant 0 : index
    %c0_78 = arith.constant 0 : index
    %262 = vector.load %arg4[%c0_74, %c2_75, %c0_76, %c0_77, %c0_78] : memref<1x3x3x1x128xf32, #tpu.memory_space<vmem>>, vector<1x1x1x1x128xf32>
    %263 = vector.shape_cast %262 : vector<1x1x1x1x128xf32> to vector<1x128xf32>
    %264 = vector.shape_cast %261 : vector<1x128xf32> to vector<1x1x1x1x128xf32>
    tpu.vector_store %arg4[%c0_74, %c2_75, %c0_76, %c0_77, %c0_78], %264 {strides = array<i32>} : memref<1x3x3x1x128xf32, #tpu.memory_space<vmem>>, vector<1x1x1x1x128xf32>,
    %265 = arith.mulf %241, %260 : vector<1x128xf32>
    %cst_79 = arith.constant 2.240000e+02 : f32
    %266 = vector.broadcast %cst_79 : f32 to vector<1x128xf32>
    %267 = arith.subf %266, %265 : vector<1x128xf32>
    %c0_80 = arith.constant 0 : index
    %c2_81 = arith.constant 2 : index
    %c1_82 = arith.constant 1 : index
    %c0_83 = arith.constant 0 : index
    %c0_84 = arith.constant 0 : index
    %268 = vector.load %arg4[%c0_80, %c2_81, %c1_82, %c0_83, %c0_84] : memref<1x3x3x1x128xf32, #tpu.memory_space<vmem>>, vector<1x1x1x1x128xf32>
    %269 = vector.shape_cast %268 : vector<1x1x1x1x128xf32> to vector<1x128xf32>
    %270 = vector.shape_cast %267 : vector<1x128xf32> to vector<1x1x1x1x128xf32>
    tpu.vector_store %arg4[%c0_80, %c2_81, %c1_82, %c0_83, %c0_84], %270 {strides = array<i32>} : memref<1x3x3x1x128xf32, #tpu.memory_space<vmem>>, vector<1x1x1x1x128xf32>,
    %c0_85 = arith.constant 0 : index
    %c2_86 = arith.constant 2 : index
    %c2_87 = arith.constant 2 : index
    %c0_88 = arith.constant 0 : index
    %c0_89 = arith.constant 0 : index
    %271 = vector.load %arg4[%c0_85, %c2_86, %c2_87, %c0_88, %c0_89] : memref<1x3x3x1x128xf32, #tpu.memory_space<vmem>>, vector<1x1x1x1x128xf32>
    %272 = vector.shape_cast %271 : vector<1x1x1x1x128xf32> to vector<1x128xf32>
    %273 = vector.shape_cast %255 : vector<1x128xf32> to vector<1x1x1x1x128xf32>
    tpu.vector_store %arg4[%c0_85, %c2_86, %c2_87, %c0_88, %c0_89], %273 {strides = array<i32>} : memref<1x3x3x1x128xf32, #tpu.memory_space<vmem>>, vector<1x1x1x1x128xf32>,
    return
  }
  func.func @transform_0(%arg0: i32, %arg1: i32, %arg2: memref<72xf32, #tpu.memory_space<smem>>) -> (i32, i32, i32, i32) {
    %c0_i32 = arith.constant 0 : i32
    %c0_i32_0 = arith.constant 0 : i32
    %c0_i32_1 = arith.constant 0 : i32
    return %arg0, %c0_i32, %arg1, %c0_i32_0 : i32, i32, i32, i32
  }
  func.func @transform_1(%arg0: i32, %arg1: i32, %arg2: memref<72xf32, #tpu.memory_space<smem>>) -> (i32, i32, i32, i32, i32) {
    %c0_i32 = arith.constant 0 : i32
    %c0_i32_0 = arith.constant 0 : i32
    %c0_i32_1 = arith.constant 0 : i32
    %c0_i32_2 = arith.constant 0 : i32
    return %arg0, %c0_i32, %c0_i32_0, %arg1, %c0_i32_1 : i32, i32, i32, i32, i32
  }
}

</mosaic_0001>

<llo_original>
// kernel: tpu_custom_call.1
$region0: #{tpu_custom_call.1}
  #allocation0 [shape = 'u32[]', space=smem, size = 0x4, offset = 0x4, fixed_abs, tag = 'smem constant byte address 0x4 - core index']
  #allocation1 [shape = 'u32[144,128]{1,0:T(1,128)}', space=vmem, size = 0x12000, scoped, tag = 'internal scratch']
  #allocation2 [shape = 's32[1]{0}', space=sflag, size = 0x4, scoped, tag = 'scoped memory for tpu_custom_call.1']
  #allocation3 [shape = 'u8[512]{0}', space=smem, size = 0x200, scoped, tag = 'prefetched SMEM operand 0']
  %s0 = inlined_call_operand.hbm [shape: f32[72], index: 0, kind: input, shape index: {}]
  %s1 = inlined_call_operand.hbm [shape: f32[2,3,1,128], index: 1, kind: input, shape index: {}]
  %s2 = inlined_call_operand.hbm [shape: f32[2,3,3,1,128], index: 2, kind: output, shape index: {}]
  %s3 = sld [smem:[#allocation0]]
  $region41: #{tpu_custom_call.1} parent=0
    _
  %s5 = ssub.s32 1, %s3
  %s6 = scalar_select 0, %s5, %s3
  %8 = dma.hbm_to_smem %s0, 16, [#allocation3], [#allocation2]
  %9 = dma.done [#allocation2], 16
  %10 = sfence
  $region1: #{tpu_custom_call.1} parent=0
    #allocation4 [shape = 'u8[3072]{0}', space=vmem, size = 0xc00, scoped, tag = 'input window, operand 1']
    #allocation5 [shape = 's32[2]{0}', space=sflag, size = 0x8, scoped, tag = 'scoped memory for tpu_custom_call.1']
    #allocation6 [shape = 's32[2]{0}', space=sflag, size = 0x8, scoped, tag = 'scoped memory for tpu_custom_call.1']
    #allocation7 [shape = 'u8[9216]{0}', space=vmem, size = 0x2400, scoped, tag = 'output window, operand 0']
    %11 = vsyncpa [#allocation5], 0
    %s12 = scalar_lea.sflag [#allocation5], 1
    %13 = vsyncpa %s12, 0
    %14 = vsyncpa [#allocation6], 0
    %s15 = scalar_lea.sflag [#allocation6], 1
    %16 = vsyncpa %s15, 0
    loop: start=0, step=1, limit=4
    $region2: #{tpu_custom_call.1} parent=1 // loop_pre_header
      _
    $region3: #{tpu_custom_call.1} parent=1 // loop_header
      %s18 = sphi 0, %s22
      %p19 = scmp.ge.s32.totalorder %s18, 4
      %s25 = sphi 0, %s37
      %s26 = sphi 0, %s33
      %s27 = sphi 0, %s25
      %s28 = sphi 0, %s26
      %s29 = sphi 0, %s27
      %s30 = sphi 0, %s28
      %s42 = sphi 0, %s44
      %s45 = sphi 0, %s42
      %s46 = sphi 0, %s45
      %s62 = sphi 0, %s46
      %s70 = sphi 0, %s72
      %s73 = sphi 0, %s70
      %s74 = sphi 0, %s73
      %s90 = sphi 0, %s74
    $region4: #{tpu_custom_call.1} parent=1 // loop_header_branch
      %21 = sbr.rel (%p19) target = $region8
    $region5: #{tpu_custom_call.1} parent=1 // loop_body
      %s23 = ssub.s32 %s18, 1
      %s24 = ssub.s32 %s18, 2
      %s31 = sadd.s32 1, %s26
      %p32 = scmp.ge.s32.totalorder %s31, 1
      %s33 = scalar_select %p32, 0, %s31
      %s34 = sadd.s32 1, %s25
      %s35 = scalar_select %p32, %s34, %s25
      %p36 = scmp.ge.s32.totalorder %s35, 2
      %s37 = scalar_select %p36, 0, %s35
      %s38 = ssub.s32 %s25, %s37
      %s39 = ssub.s32 %s26, %s33
      %s40 = sor.u32 %s38, %s39
      %p41 = scmp.eq.s32.totalorder %s40, 0
      %s43 = sadd.s32 %s42, 1
      %s44 = scalar_select %p41, %s42, %s43
      %p47 = pneg %p41
      %p48 = scmp.eq.s32.totalorder %s18, 1
      %p49 = por %p47, %p48
      %p50 = scmp.ne.s32.totalorder %s42, %s45
      %p51 = scmp.eq.s32.totalorder %s18, 0
      %p52 = por %p50, %p51
      %p53 = scmp.ne.s32.totalorder %s42, %s45
      %p54 = scmp.eq.s32.totalorder %s23, 1
      %p55 = por %p53, %p54
      %p56 = scmp.ne.s32.totalorder %s45, %s46
      %p57 = scmp.eq.s32.totalorder %s23, 0
      %p58 = por %p56, %p57
      %p59 = scmp.ne.s32.totalorder %s45, %s46
      %p60 = scmp.eq.s32.totalorder %s24, 1
      %p61 = por %p59, %p60
      %p63 = scmp.ne.s32.totalorder %s46, %s62
      %p64 = scmp.eq.s32.totalorder %s24, 0
      %p65 = por %p63, %p64
      %s66 = ssub.s32 %s25, %s37
      %s67 = ssub.s32 %s26, %s33
      %s68 = sor.u32 %s66, %s67
      %p69 = scmp.eq.s32.totalorder %s68, 0
      %s71 = sadd.s32 %s70, 1
      %s72 = scalar_select %p69, %s70, %s71
      %p75 = pneg %p69
      %p76 = scmp.eq.s32.totalorder %s18, 1
      %p77 = por %p75, %p76
      %p78 = scmp.ne.s32.totalorder %s70, %s73
      %p79 = scmp.eq.s32.totalorder %s18, 0
      %p80 = por %p78, %p79
      %p81 = scmp.ne.s32.totalorder %s70, %s73
      %p82 = scmp.eq.s32.totalorder %s23, 1
      %p83 = por %p81, %p82
      %p84 = scmp.ne.s32.totalorder %s73, %s74
      %p85 = scmp.eq.s32.totalorder %s23, 0
      %p86 = por %p84, %p85
      %p87 = scmp.ne.s32.totalorder %s73, %s74
      %p88 = scmp.eq.s32.totalorder %s24, 1
      %p89 = por %p87, %p88
      %p91 = scmp.ne.s32.totalorder %s74, %s90
      %p92 = scmp.eq.s32.totalorder %s24, 0
      %p93 = por %p91, %p92
      %p94 = scmp.le.s32.totalorder 1, %s18
      %p95 = scmp.lt.s32.totalorder %s18, 3
      %p96 = pnand %p94, %p95
      %p97 = pneg %p96
      // Predicated region
      $region9: #{tpu_custom_call.1} parent=5 // pred_check
        _
      $region10: #{tpu_custom_call.1} parent=5 // pred_check_branch
        %99 = sbr.rel (%p96) target = $region12
      $region11: #{tpu_custom_call.1} parent=5 // pred_region
        %s100 = ssub.s32 %s18, 1
      $region12: #{tpu_custom_call.1} parent=5 // pred_fallthru
        _
      %p101 = scmp.lt.s32.totalorder %s18, 2
      // Predicated region
      $region13: #{tpu_custom_call.1} parent=5 // pred_check
        %p102 = pneg %p101
      $region14: #{tpu_custom_call.1} parent=5 // pred_check_branch
        %104 = sbr.rel (%p102) target = $region16
      $region15: #{tpu_custom_call.1} parent=5 // pred_region
        // Predicated region
        $region17: #{tpu_custom_call.1} parent=15 // pred_check
          %p105 = pneg %p52
        $region18: #{tpu_custom_call.1} parent=15 // pred_check_branch
          %107 = sbr.rel (%p105) target = $region20
        $region19: #{tpu_custom_call.1} parent=15 // pred_region
          %s108 = sand.u32 %s42, 1
          %s109 = scalar_lea.sflag [#allocation5], %s108
          %s110 = sand.u32 %s42, 1
          %s111 = smul.addr %s110, 3
          %s112 = scalar_lea.vmem [#allocation4], %s111
          %s114 = ssub.s32 48, 48
          %115 = vsyncadd %s109, %s114
          %s116 = smul.addr %s25, 3
          %s117 = sadd.s32 %s26, %s116
          %s118 = smul.addr %s117, 16
          %s119 = scalar_lea.hbm %s1, %s118
          %s120 = sshll.u32 %s112, 4
          %s121 = int_to_ptr.vmem [resolvable:$true] %s120
          %126 = dma.hbm_to_vmem [thread:$0]  %s119, 48, %s121, %s109, 16, 16, 1
        $region20: #{tpu_custom_call.1} parent=15 // pred_fallthru
          _
      $region16: #{tpu_custom_call.1} parent=5 // pred_fallthru
        _
      %p127 = scmp.le.s32.totalorder 1, %s18
      %p128 = scmp.lt.s32.totalorder %s18, 3
      %p129 = pnand %p127, %p128
      %p130 = pneg %p129
      // Predicated region
      $region21: #{tpu_custom_call.1} parent=5 // pred_check
        _
      $region22: #{tpu_custom_call.1} parent=5 // pred_check_branch
        %132 = sbr.rel (%p129) target = $region24
      $region23: #{tpu_custom_call.1} parent=5 // pred_region
        %s133 = ssub.s32 %s18, 1
        %s134 = sand.u32 %s45, 1
        %s135 = scalar_lea.sflag [#allocation5], %s134
        %s136 = sand.u32 %s45, 1
        %s137 = smul.addr %s136, 3
        %s138 = scalar_lea.vmem [#allocation4], %s137
        // Predicated region
        $region25: #{tpu_custom_call.1} parent=23 // pred_check
          %p139 = pneg %p58
        $region26: #{tpu_custom_call.1} parent=23 // pred_check_branch
          %141 = sbr.rel (%p139) target = $region28
        $region27: #{tpu_custom_call.1} parent=23 // pred_region
          %142 = dma.done %s135, 48
        $region28: #{tpu_custom_call.1} parent=23 // pred_fallthru
          _
        %s143 = sand.u32 %s45, 1
        %s144 = scalar_lea.sflag [#allocation5], %s143
        %s145 = sand.u32 %s45, 1
        %s146 = smul.addr %s145, 3
        %s147 = scalar_lea.vmem [#allocation4], %s146
        %p148 = pneg %p58
        %p149 = pneg %p55
        %p150 = pneg %p86
        %p151 = pneg %p83
        %s152 = sand.u32 %s73, 1
        %s153 = scalar_lea.sflag [#allocation6], %s152
        %s154 = sand.u32 %s73, 1
        %s155 = smul.addr %s154, 9
        %s156 = scalar_lea.vmem [#allocation7], %s155
        %v157 = vld [vmem:[%s138] sm:$0x1]
        %s158 = scalar_lea.vmem %s138, 1 [#allocation4]
        %v159 = vld [vmem:[%s158] sm:$0x1]
        %s160 = scalar_lea.vmem %s138, 2 [#allocation4]
        %v161 = vld [vmem:[%s160] sm:$0x1]
        %s162 = smul.u32 %s27, 36
        %s163 = sld [smem:[#allocation3 + %s162]]
        %s164 = sadd.s32 %s162, 1
        %s165 = sld [smem:[#allocation3 + %s164]]
        %s166 = sadd.s32 %s162, 2
        %s167 = sld [smem:[#allocation3 + %s166]]
        %s168 = sadd.s32 %s162, 3
        %s169 = sld [smem:[#allocation3 + %s168]]
        %s170 = sadd.s32 %s162, 4
        %s171 = sld [smem:[#allocation3 + %s170]]
        %s172 = sadd.s32 %s162, 5
        %s173 = sld [smem:[#allocation3 + %s172]]
        %s174 = sadd.s32 %s162, 6
        %s175 = sld [smem:[#allocation3 + %s174]]
        %s176 = sadd.s32 %s162, 7
        %s177 = sld [smem:[#allocation3 + %s176]]
        %s178 = sadd.s32 %s162, 8
        %s179 = sld [smem:[#allocation3 + %s178]]
        %s180 = sadd.s32 %s162, 9
        %s181 = sld [smem:[#allocation3 + %s180]]
        %s182 = sadd.s32 %s162, 10
        %s183 = sld [smem:[#allocation3 + %s182]]
        %s184 = sadd.s32 %s162, 11
        %s185 = sld [smem:[#allocation3 + %s184]]
        %v186 = vstv %s163
        %v187 = vmul.f32 %v157, %v186
        %v188 = vstv %s169
        %v189 = vmul.f32 %v159, %v188
        %v190 = vadd.f32 %v187, %v189
        %v191 = vstv %s175
        %v192 = vmul.f32 %v161, %v191
        %v193 = vadd.f32 %v190, %v192
        %v194 = vstv %s181
        %v195 = vadd.f32 %v193, %v194
        %v196 = vstv %s165
        %v197 = vmul.f32 %v157, %v196
        %v198 = vstv %s171
        %v199 = vmul.f32 %v159, %v198
        %v200 = vadd.f32 %v197, %v199
        %v201 = vstv %s177
        %v202 = vmul.f32 %v161, %v201
        %v203 = vadd.f32 %v200, %v202
        %v204 = vstv %s183
        %v205 = vadd.f32 %v203, %v204
        %v206 = vstv %s167
        %v207 = vmul.f32 %v157, %v206
        %v208 = vstv %s173
        %v209 = vmul.f32 %v159, %v208
        %v210 = vadd.f32 %v207, %v209
        %v211 = vstv %s179
        %v212 = vmul.f32 %v161, %v211
        %v213 = vadd.f32 %v210, %v212
        %v214 = vstv %s185
        %v215 = vadd.f32 %v213, %v214
        %vm216 = vcmp.ne.f32.partialorder %v215, 0.0
        %v217 = vsel %vm216, %v215, 1e-08
        %v218 = vrcp.pop %v217
        %v219 = vmul.f32 %v217, %v218
        %v220 = vsub.f32 2.0, %v219
        %v221 = vmul.f32 %v218, %v220
        %v222 = vmul.f32 %v195, %v221
        %223 = vst [vmem:[%s156] sm:$0x1] %v222
        %v224 = vmul.f32 %v205, %v221
        %v225 = vsub.f32 224.0, %v224
        %s226 = scalar_lea.vmem %s156, 1 [#allocation7]
        %227 = vst [vmem:[%s226] sm:$0x1] %v225
        %s228 = scalar_lea.vmem %s156, 2 [#allocation7]
        %229 = vst [vmem:[%s228] sm:$0x1] %v217
        %s230 = sadd.s32 %s162, 12
        %s231 = sld [smem:[#allocation3 + %s230]]
        %s232 = sadd.s32 %s162, 13
        %s233 = sld [smem:[#allocation3 + %s232]]
        %s234 = sadd.s32 %s162, 14
        %s235 = sld [smem:[#allocation3 + %s234]]
        %s236 = sadd.s32 %s162, 15
        %s237 = sld [smem:[#allocation3 + %s236]]
        %s238 = sadd.s32 %s162, 16
        %s239 = sld [smem:[#allocation3 + %s238]]
        %s240 = sadd.s32 %s162, 17
        %s241 = sld [smem:[#allocation3 + %s240]]
        %s242 = sadd.s32 %s162, 18
        %s243 = sld [smem:[#allocation3 + %s242]]
        %s244 = sadd.s32 %s162, 19
        %s245 = sld [smem:[#allocation3 + %s244]]
        %s246 = sadd.s32 %s162, 20
        %s247 = sld [smem:[#allocation3 + %s246]]
        %s248 = sadd.s32 %s162, 21
        %s249 = sld [smem:[#allocation3 + %s248]]
        %s250 = sadd.s32 %s162, 22
        %s251 = sld [smem:[#allocation3 + %s250]]
        %s252 = sadd.s32 %s162, 23
        %s253 = sld [smem:[#allocation3 + %s252]]
        %v254 = vstv %s231
        %v255 = vmul.f32 %v157, %v254
        %v256 = vstv %s237
        %v257 = vmul.f32 %v159, %v256
        %v258 = vadd.f32 %v255, %v257
        %v259 = vstv %s243
        %v260 = vmul.f32 %v161, %v259
        %v261 = vadd.f32 %v258, %v260
        %v262 = vstv %s249
        %v263 = vadd.f32 %v261, %v262
        %v264 = vstv %s233
        %v265 = vmul.f32 %v157, %v264
        %v266 = vstv %s239
        %v267 = vmul.f32 %v159, %v266
        %v268 = vadd.f32 %v265, %v267
        %v269 = vstv %s245
        %v270 = vmul.f32 %v161, %v269
        %v271 = vadd.f32 %v268, %v270
        %v272 = vstv %s251
        %v273 = vadd.f32 %v271, %v272
        %v274 = vstv %s235
        %v275 = vmul.f32 %v157, %v274
        %v276 = vstv %s241
        %v277 = vmul.f32 %v159, %v276
        %v278 = vadd.f32 %v275, %v277
        %v279 = vstv %s247
        %v280 = vmul.f32 %v161, %v279
        %v281 = vadd.f32 %v278, %v280
        %v282 = vstv %s253
        %v283 = vadd.f32 %v281, %v282
        %vm284 = vcmp.ne.f32.partialorder %v283, 0.0
        %v285 = vsel %vm284, %v283, 1e-08
        %v286 = vrcp.pop %v285
        %v287 = vmul.f32 %v285, %v286
        %v288 = vsub.f32 2.0, %v287
        %v289 = vmul.f32 %v286, %v288
        %v290 = vmul.f32 %v263, %v289
        %s291 = scalar_lea.vmem %s156, 3 [#allocation7]
        %292 = vst [vmem:[%s291] sm:$0x1] %v290
        %v293 = vmul.f32 %v273, %v289
        %v294 = vsub.f32 224.0, %v293
        %s295 = scalar_lea.vmem %s156, 4 [#allocation7]
        %296 = vst [vmem:[%s295] sm:$0x1] %v294
        %s297 = scalar_lea.vmem %s156, 5 [#allocation7]
        %298 = vst [vmem:[%s297] sm:$0x1] %v285
        %s299 = sadd.s32 %s162, 24
        %s300 = sld [smem:[#allocation3 + %s299]]
        %s301 = sadd.s32 %s162, 25
        %s302 = sld [smem:[#allocation3 + %s301]]
        %s303 = sadd.s32 %s162, 26
        %s304 = sld [smem:[#allocation3 + %s303]]
        %s305 = sadd.s32 %s162, 27
        %s306 = sld [smem:[#allocation3 + %s305]]
        %s307 = sadd.s32 %s162, 28
        %s308 = sld [smem:[#allocation3 + %s307]]
        %s309 = sadd.s32 %s162, 29
        %s310 = sld [smem:[#allocation3 + %s309]]
        %s311 = sadd.s32 %s162, 30
        %s312 = sld [smem:[#allocation3 + %s311]]
        %s313 = sadd.s32 %s162, 31
        %s314 = sld [smem:[#allocation3 + %s313]]
        %s315 = sadd.s32 %s162, 32
        %s316 = sld [smem:[#allocation3 + %s315]]
        %s317 = sadd.s32 %s162, 33
        %s318 = sld [smem:[#allocation3 + %s317]]
        %s319 = sadd.s32 %s162, 34
        %s320 = sld [smem:[#allocation3 + %s319]]
        %s321 = sadd.s32 %s162, 35
        %s322 = sld [smem:[#allocation3 + %s321]]
        %v323 = vstv %s300
        %v324 = vmul.f32 %v157, %v323
        %v325 = vstv %s306
        %v326 = vmul.f32 %v159, %v325
        %v327 = vadd.f32 %v324, %v326
        %v328 = vstv %s312
        %v329 = vmul.f32 %v161, %v328
        %v330 = vadd.f32 %v327, %v329
        %v331 = vstv %s318
        %v332 = vadd.f32 %v330, %v331
        %v333 = vstv %s302
        %v334 = vmul.f32 %v157, %v333
        %v335 = vstv %s308
        %v336 = vmul.f32 %v159, %v335
        %v337 = vadd.f32 %v334, %v336
        %v338 = vstv %s314
        %v339 = vmul.f32 %v161, %v338
        %v340 = vadd.f32 %v337, %v339
        %v341 = vstv %s320
        %v342 = vadd.f32 %v340, %v341
        %v343 = vstv %s304
        %v344 = vmul.f32 %v157, %v343
        %v345 = vstv %s310
        %v346 = vmul.f32 %v159, %v345
        %v347 = vadd.f32 %v344, %v346
        %v348 = vstv %s316
        %v349 = vmul.f32 %v161, %v348
        %v350 = vadd.f32 %v347, %v349
        %v351 = vstv %s322
        %v352 = vadd.f32 %v350, %v351
        %vm353 = vcmp.ne.f32.partialorder %v352, 0.0
        %v354 = vsel %vm353, %v352, 1e-08
        %v355 = vrcp.pop %v354
        %v356 = vmul.f32 %v354, %v355
        %v357 = vsub.f32 2.0, %v356
        %v358 = vmul.f32 %v355, %v357
        %v359 = vmul.f32 %v332, %v358
        %s360 = scalar_lea.vmem %s156, 6 [#allocation7]
        %361 = vst [vmem:[%s360] sm:$0x1] %v359
        %v362 = vmul.f32 %v342, %v358
        %v363 = vsub.f32 224.0, %v362
        %s364 = scalar_lea.vmem %s156, 7 [#allocation7]
        %365 = vst [vmem:[%s364] sm:$0x1] %v363
        %s366 = scalar_lea.vmem %s156, 8 [#allocation7]
        %367 = vst [vmem:[%s366] sm:$0x1] %v354
        %s368 = sand.u32 %s73, 1
        %s369 = scalar_lea.sflag [#allocation6], %s368
        %s370 = sand.u32 %s73, 1
        %s371 = smul.addr %s370, 9
        %s372 = scalar_lea.vmem [#allocation7], %s371
        // Predicated region
        $region29: #{tpu_custom_call.1} parent=23 // pred_check
          %p373 = pneg %p83
        $region30: #{tpu_custom_call.1} parent=23 // pred_check_branch
          %375 = sbr.rel (%p373) target = $region32
        $region31: #{tpu_custom_call.1} parent=23 // pred_region
          %s377 = ssub.s32 144, 144
          %378 = vsyncadd %s369, %s377
          %s379 = smul.addr %s27, 9
          %s380 = sadd.s32 %s28, %s379
          %s381 = smul.addr %s380, 16
          %s382 = scalar_lea.hbm %s2, %s381
          %s383 = sshll.u32 %s372, 4
          %s384 = int_to_ptr.vmem [resolvable:$true] %s383
          %389 = dma.vmem_to_hbm [thread:$0]  %s384, 144, %s382, %s369, 16, 16, 1
        $region32: #{tpu_custom_call.1} parent=23 // pred_fallthru
          _
      $region24: #{tpu_custom_call.1} parent=5 // pred_fallthru
        _
      %p390 = scmp.le.s32.totalorder 2, %s18
      // Predicated region
      $region33: #{tpu_custom_call.1} parent=5 // pred_check
        %p391 = pneg %p390
      $region34: #{tpu_custom_call.1} parent=5 // pred_check_branch
        %393 = sbr.rel (%p391) target = $region36
      $region35: #{tpu_custom_call.1} parent=5 // pred_region
        %s394 = ssub.s32 %s18, 2
        // Predicated region
        $region37: #{tpu_custom_call.1} parent=35 // pred_check
          %p395 = pneg %p89
        $region38: #{tpu_custom_call.1} parent=35 // pred_check_branch
          %397 = sbr.rel (%p395) target = $region40
        $region39: #{tpu_custom_call.1} parent=35 // pred_region
          %s398 = sand.u32 %s74, 1
          %s399 = scalar_lea.sflag [#allocation6], %s398
          %s400 = sand.u32 %s74, 1
          %s401 = smul.addr %s400, 9
          %s402 = scalar_lea.vmem [#allocation7], %s401
          %403 = dma.done %s399, 144
        $region40: #{tpu_custom_call.1} parent=35 // pred_fallthru
          _
      $region36: #{tpu_custom_call.1} parent=5 // pred_fallthru
        _
    $region6: #{tpu_custom_call.1} parent=1 // loop_footer
      %s22 = sadd.s32 1, %s18
    $region7: #{tpu_custom_call.1} parent=1 // loop_footer_branch
      %17 = sbr.rel target = $region3
    $region8: #{tpu_custom_call.1} parent=1 // loop_exit
      _
    %404 = vsyncpa [#allocation5], 1
    %s405 = scalar_lea.sflag [#allocation5], 1
    %406 = vsyncpa %s405, 1
    %407 = vsyncpa [#allocation6], 1
    %s408 = scalar_lea.sflag [#allocation6], 1
    %409 = vsyncpa %s408, 1

</llo_original>
